<compile_context>
chip_gen: v7x
topology: tpu7x:2x2x1
jax: 0.10.0
libtpu: 0.0.40
codegen_flags: <defaults>
</compile_context>

<pallas_src>
import jax
import jax.numpy as jnp
from jax.experimental import pallas as pl
from jax.experimental.pallas import tpu as pltpu


def _fgconv_kernel(att_ref, edge_ref, adj_ref, wa_ref, we_ref, out_ref):
    # Block shapes:
    #   att_ref : (1, N, F)             full node features (resident per batch)
    #   edge_ref: (1, 3, TILE_I, N)     channel-first edge row-tile
    #   adj_ref : (1, TILE_I, N)        adjacency row-tile
    #   wa_ref  : (2F, F_out_pad)       [Wa2 ; Wa1] (acts on [att[i] | att[j]])
    #   we_ref  : (3, F_out_pad)        acts on edge[i, j, :]
    #   out_ref : (1, TILE_I, F_out_pad)
    tile_i = adj_ref.shape[1]
    f32 = jnp.float32

    adj = adj_ref[0]                     # (TILE_I, N)
    att = att_ref[0]                     # (N, F)
    wa = wa_ref[...]                     # (2F, F_out_pad)
    we = we_ref[...]                     # (3, F_out_pad)

    adj_f = adj.astype(f32)

    # degree of each row in the tile: full-width lane reduction over j.
    deg = jnp.sum(adj_f, axis=1, keepdims=True)                      # (TILE_I, 1)

    # att rows belonging to this row tile (the "self" features att[i]).
    i0 = pl.multiple_of(pl.program_id(1) * tile_i, tile_i)
    att_i = att_ref[0, pl.ds(i0, tile_i), :]                         # (TILE_I, F)

    # neighbor aggregation on the MXU: (adj @ att)[i] = sum_j adj[i,j] * att[j]
    neigh = jnp.dot(adj.astype(att.dtype), att,
                    preferred_element_type=f32)                      # (TILE_I, F)

    # fused feature matmul: [deg*att[i] | adj@att] @ [Wa2 ; Wa1]
    x = jnp.concatenate([deg * att_i.astype(f32), neigh], axis=-1)   # (TILE_I, 2F)
    acc = jnp.dot(x, wa.astype(f32), preferred_element_type=f32)     # (TILE_I, F_out_pad)

    # edge term: per-channel lane reduction over j + rank-1 update with We row.
    for c in range(3):
        e_c = edge_ref[0, c].astype(f32)                             # (TILE_I, N)
        ew_c = jnp.sum(e_c * adj_f, axis=1, keepdims=True)           # (TILE_I, 1)
        acc = acc + ew_c * we[c:c + 1, :].astype(f32)                # (TILE_I, F_out_pad)

    # normalization: 1 / (deg + 0.001) on the EUP (approx reciprocal).
    inv = pl.reciprocal(deg + 0.001, approx=True)                    # (TILE_I, 1)
    out_ref[0] = (acc * inv).astype(out_ref.dtype)


def _pick_tile_i(n, target=256):
    """Largest row tile <= target that divides n and is a multiple of 8.

    target=256 keeps 2x(adj+edge) f32 tiles well under v7x's 64 MiB VMEM even
    for N~2048; on v5e/v6e pass tile_i=512/1024 (and raise vmem_limit_bytes).
    """
    if n <= target:
        return n
    t = (target // 8) * 8
    while t >= 8:
        if n % t == 0:
            return t
        t -= 8
    return n  # fallback: whole row range in one tile


def fgraph_convolution(att, edge, adj, W, *, tile_i=None, stream_dtype=None,
                       vmem_limit_bytes=None):
    """att: (B,N,F), edge: (B,N,N,3), adj: (B,N,N), W: (F_out, 2F+3) -> (B,N,F_out)."""
    B, N, F = att.shape
    F_out = W.shape[0]
    assert W.shape[1] == 2 * F + 3
    assert adj.shape == (B, N, N)
    assert edge.shape == (B, N, N, 3)

    # Channel-first edge layout: j becomes the dense 128-lane axis in-kernel.
    edge_cf = jnp.transpose(edge, (0, 3, 1, 2))                      # (B, 3, N, N)

    # Optional bf16 compression of the dominant HBM streams (adj is 0/1, exact;
    # edge loses ~3 decimal digits -> validate with a looser tolerance).
    if stream_dtype is not None:
        edge_cf = edge_cf.astype(stream_dtype)
        adj = adj.astype(stream_dtype)

    # Split the Linear weight into its concat blocks, transposed to [in, out],
    # fuse the two att blocks along K, and pad F_out to a lane-dense 128-multiple.
    wa2 = jnp.transpose(W[:, :F])                                    # (F, F_out) -> att[i]
    wa1 = jnp.transpose(W[:, F:2 * F])                               # (F, F_out) -> att[j]
    we = jnp.transpose(W[:, 2 * F:])                                 # (3, F_out) -> edge[i,j]
    wa = jnp.concatenate([wa2, wa1], axis=0)                         # (2F, F_out)

    F_out_pad = ((F_out + 127) // 128) * 128
    pad = F_out_pad - F_out
    if pad:
        wa = jnp.pad(wa, ((0, 0), (0, pad)))
        we = jnp.pad(we, ((0, 0), (0, pad)))

    if tile_i is None:
        tile_i = _pick_tile_i(N)
    assert N % tile_i == 0, "tile_i must divide N"
    grid = (B, N // tile_i)

    out = pl.pallas_call(
        _fgconv_kernel,
        out_shape=jax.ShapeDtypeStruct((B, N, F_out_pad), att.dtype),
        grid=grid,
        in_specs=[
            pl.BlockSpec((1, N, F), lambda b, i: (b, 0, 0)),          # att (full, per batch)
            pl.BlockSpec((1, 3, tile_i, N), lambda b, i: (b, 0, i, 0)),  # edge row tile
            pl.BlockSpec((1, tile_i, N), lambda b, i: (b, i, 0)),     # adj row tile
            pl.BlockSpec((2 * F, F_out_pad), lambda b, i: (0, 0)),    # [Wa2;Wa1]
            pl.BlockSpec((3, F_out_pad), lambda b, i: (0, 0)),        # We
        ],
        out_specs=pl.BlockSpec((1, tile_i, F_out_pad), lambda b, i: (b, i, 0)),
        compiler_params=pltpu.CompilerParams(
            dimension_semantics=("parallel", "parallel"),
            vmem_limit_bytes=vmem_limit_bytes),
    )(att, edge_cf, adj, wa, we)

    return out[:, :, :F_out]


def _reference(att, edge, adj, W):
    """Pure-JAX transcription of the PyTorch forward (for validation)."""
    B, N, F = att.shape
    a1 = jnp.broadcast_to(att[:, None, :, :], (B, N, N, F))   # a1[b,i,j] = att[b,j]
    a2 = jnp.broadcast_to(att[:, :, None, :], (B, N, N, F))   # a2[b,i,j] = att[b,i]
    pw = jnp.concatenate([a2, a1, edge], axis=3)              # (B,N,N,2F+3)
    pw = jnp.einsum('bijk,ok->bijo', pw, W)                   # Linear, no bias
    vadj = adj[..., None]                                     # (B,N,N,1)
    pw = pw * vadj
    nrml = jnp.sum(vadj, axis=2)                              # (B,N,1)
    pw = jnp.sum(pw, axis=2)                                  # (B,N,F_out)
    return pw / (nrml + 0.001)


def _make_inputs(key, B, N, F_in, F_out):
    k_att, k_edge, k_adj, k_w = jax.random.split(key, 4)
    att = jax.random.normal(k_att, (B, N, F_in), dtype=jnp.float32)
    edge = jax.random.normal(k_edge, (B, N, N, 3), dtype=jnp.float32)
    adj = (jax.random.uniform(k_adj, (B, N, N)) > 0.5).astype(jnp.float32)
    fan_in = 2 * F_in + 3
    bound = 1.0 / (fan_in ** 0.5)
    W = jax.random.uniform(k_w, (F_out, fan_in), minval=-bound, maxval=bound,
                           dtype=jnp.float32)
    return att, edge, adj, W


if __name__ == "__main__":
    key = jax.random.PRNGKey(0)
    k0, k1 = jax.random.split(key)

    # Small shape matching the module defaults (single row tile per batch).
    B, N, F_in, F_out = 2, 8, 4, 8
    att, edge, adj, W = _make_inputs(k0, B, N, F_in, F_out)
    out = jax.block_until_ready(fgraph_convolution(att, edge, adj, W))
    ref = _reference(att, edge, adj, W)
    assert out.shape == (B, N, F_out)
    # approx=True reciprocal (EUP) has ~2^-12 relative error -> compare at 2e-3.
    assert jnp.allclose(out, ref, rtol=2e-3, atol=2e-3), "mismatch vs reference (small)"

    # Larger shape exercising the row-tiled grid (B, N//tile_i) and F_out padding.
    B2, N2, F_in2, F_out2 = 2, 256, 8, 16
    att2, edge2, adj2, W2 = _make_inputs(k1, B2, N2, F_in2, F_out2)
    out2 = jax.block_until_ready(
        fgraph_convolution(att2, edge2, adj2, W2, tile_i=64))
    ref2 = _reference(att2, edge2, adj2, W2)
    assert out2.shape == (B2, N2, F_out2)
    assert jnp.allclose(out2, ref2, rtol=2e-3, atol=2e-3), "mismatch vs reference (tiled)"

    print("KERNEL_OK")
</pallas_src>

<mosaic_0001>
module attributes {stable_mosaic.version = 11 : i64} {
  func.func @_fgconv_kernel(%arg0: i32, %arg1: i32, %arg2: memref<1x8x4xf32, #tpu.memory_space<vmem>>, %arg3: memref<1x3x8x8xf32, #tpu.memory_space<vmem>>, %arg4: memref<1x8x8xf32, #tpu.memory_space<vmem>>, %arg5: memref<8x128xf32, #tpu.memory_space<vmem>>, %arg6: memref<3x128xf32, #tpu.memory_space<vmem>>, %arg7: memref<1x8x128xf32, #tpu.memory_space<vmem>>) attributes {dimension_semantics = [#tpu.dimension_semantics<parallel>, #tpu.dimension_semantics<parallel>], iteration_bounds = array<i64: 2, 1>, scalar_prefetch = 0 : i64, scratch_operands = 0 : i64, tpu.core_type = #tpu.core_type<tc>, window_params = [{transform_indices = @transform_0, window_bounds = array<i64: 1, 8, 4>}, {transform_indices = @transform_1, window_bounds = array<i64: 1, 3, 8, 8>}, {transform_indices = @transform_2, window_bounds = array<i64: 1, 8, 8>}, {pipeline_mode = #tpu.pipeline_mode<synchronous>, transform_indices = @transform_3, window_bounds = array<i64: 8, 128>}, {pipeline_mode = #tpu.pipeline_mode<synchronous>, transform_indices = @transform_4, window_bounds = array<i64: 3, 128>}, {transform_indices = @transform_5, window_bounds = array<i64: 1, 8, 128>}]} {
    %c0 = arith.constant 0 : index
    %c0_0 = arith.constant 0 : index
    %c0_1 = arith.constant 0 : index
    %0 = vector.load %arg4[%c0, %c0_0, %c0_1] : memref<1x8x8xf32, #tpu.memory_space<vmem>>, vector<1x8x8xf32>
    %1 = vector.shape_cast %0 : vector<1x8x8xf32> to vector<8x8xf32>
    %c0_2 = arith.constant 0 : index
    %c0_3 = arith.constant 0 : index
    %c0_4 = arith.constant 0 : index
    %2 = vector.load %arg2[%c0_2, %c0_3, %c0_4] : memref<1x8x4xf32, #tpu.memory_space<vmem>>, vector<1x8x4xf32>
    %3 = vector.shape_cast %2 : vector<1x8x4xf32> to vector<8x4xf32>
    %c0_5 = arith.constant 0 : index
    %c0_6 = arith.constant 0 : index
    %4 = vector.load %arg5[%c0_5, %c0_6] : memref<8x128xf32, #tpu.memory_space<vmem>>, vector<8x128xf32>
    %c0_7 = arith.constant 0 : index
    %c0_8 = arith.constant 0 : index
    %5 = vector.load %arg6[%c0_7, %c0_8] : memref<3x128xf32, #tpu.memory_space<vmem>>, vector<3x128xf32>
    %cst = arith.constant dense<0.000000e+00> : vector<8xf32>
    %6 = vector.multi_reduction <add>, %1, %cst [1] : vector<8x8xf32> to vector<8xf32>
    %7 = vector.shape_cast %6 : vector<8xf32> to vector<8x1xf32>
    %c8_i32 = arith.constant 8 : i32
    %8 = arith.muli %arg1, %c8_i32 : i32
    %9 = tpu.assume_multiple %8, 8 : i32
    %c0_9 = arith.constant 0 : index
    %10 = arith.index_cast %9 : i32 to index
    %c0_10 = arith.constant 0 : index
    %11 = vector.load %arg2[%c0_9, %10, %c0_10] : memref<1x8x4xf32, #tpu.memory_space<vmem>>, vector<1x8x4xf32>
    %12 = vector.shape_cast %11 : vector<1x8x4xf32> to vector<8x4xf32>
    %cst_11 = arith.constant dense<0.000000e+00> : vector<8x4xf32>
    %13 = tpu.matmul %1, %3, %cst_11 {dimension_numbers = #tpu.dot_dimension_numbers<[1], [0], [0], [1], [0, 0, 1, 1], [], []>} : vector<8x8xf32>, vector<8x4xf32>, vector<8x4xf32> -> vector<8x4xf32>
    %14 = vector.broadcast %7 : vector<8x1xf32> to vector<8x4xf32>
    %15 = arith.mulf %14, %12 : vector<8x4xf32>
    %16 = tpu.concatenate %15, %13 in 1 : vector<8x4xf32>, vector<8x4xf32> -> vector<8x8xf32>
    %cst_12 = arith.constant dense<0.000000e+00> : vector<8x128xf32>
    %17 = tpu.matmul %16, %4, %cst_12 {dimension_numbers = #tpu.dot_dimension_numbers<[1], [0], [0], [1], [0, 0, 1, 1], [], []>} : vector<8x8xf32>, vector<8x128xf32>, vector<8x128xf32> -> vector<8x128xf32>
    %c0_13 = arith.constant 0 : index
    %c0_14 = arith.constant 0 : index
    %c0_15 = arith.constant 0 : index
    %c0_16 = arith.constant 0 : index
    %18 = vector.load %arg3[%c0_13, %c0_14, %c0_15, %c0_16] : memref<1x3x8x8xf32, #tpu.memory_space<vmem>>, vector<1x1x8x8xf32>
    %19 = vector.shape_cast %18 : vector<1x1x8x8xf32> to vector<8x8xf32>
    %20 = arith.mulf %19, %1 : vector<8x8xf32>
    %cst_17 = arith.constant dense<0.000000e+00> : vector<8xf32>
    %21 = vector.multi_reduction <add>, %20, %cst_17 [1] : vector<8x8xf32> to vector<8xf32>
    %22 = vector.shape_cast %21 : vector<8xf32> to vector<8x1xf32>
    %23 = vector.extract_strided_slice %5 {offsets = [0, 0], sizes = [1, 128], strides = [1, 1]} : vector<3x128xf32> to vector<1x128xf32>
    %24 = vector.broadcast %22 : vector<8x1xf32> to vector<8x128xf32>
    %25 = vector.broadcast %23 : vector<1x128xf32> to vector<8x128xf32>
    %26 = arith.mulf %24, %25 : vector<8x128xf32>
    %27 = arith.addf %17, %26 : vector<8x128xf32>
    %c0_18 = arith.constant 0 : index
    %c1 = arith.constant 1 : index
    %c0_19 = arith.constant 0 : index
    %c0_20 = arith.constant 0 : index
    %28 = vector.load %arg3[%c0_18, %c1, %c0_19, %c0_20] : memref<1x3x8x8xf32, #tpu.memory_space<vmem>>, vector<1x1x8x8xf32>
    %29 = vector.shape_cast %28 : vector<1x1x8x8xf32> to vector<8x8xf32>
    %30 = arith.mulf %29, %1 : vector<8x8xf32>
    %cst_21 = arith.constant dense<0.000000e+00> : vector<8xf32>
    %31 = vector.multi_reduction <add>, %30, %cst_21 [1] : vector<8x8xf32> to vector<8xf32>
    %32 = vector.shape_cast %31 : vector<8xf32> to vector<8x1xf32>
    %33 = vector.extract_strided_slice %5 {offsets = [1, 0], sizes = [1, 128], strides = [1, 1]} : vector<3x128xf32> to vector<1x128xf32>
    %34 = vector.broadcast %32 : vector<8x1xf32> to vector<8x128xf32>
    %35 = vector.broadcast %33 : vector<1x128xf32> to vector<8x128xf32>
    %36 = arith.mulf %34, %35 : vector<8x128xf32>
    %37 = arith.addf %27, %36 : vector<8x128xf32>
    %c0_22 = arith.constant 0 : index
    %c2 = arith.constant 2 : index
    %c0_23 = arith.constant 0 : index
    %c0_24 = arith.constant 0 : index
    %38 = vector.load %arg3[%c0_22, %c2, %c0_23, %c0_24] : memref<1x3x8x8xf32, #tpu.memory_space<vmem>>, vector<1x1x8x8xf32>
    %39 = vector.shape_cast %38 : vector<1x1x8x8xf32> to vector<8x8xf32>
    %40 = arith.mulf %39, %1 : vector<8x8xf32>
    %cst_25 = arith.constant dense<0.000000e+00> : vector<8xf32>
    %41 = vector.multi_reduction <add>, %40, %cst_25 [1] : vector<8x8xf32> to vector<8xf32>
    %42 = vector.shape_cast %41 : vector<8xf32> to vector<8x1xf32>
    %43 = vector.extract_strided_slice %5 {offsets = [2, 0], sizes = [1, 128], strides = [1, 1]} : vector<3x128xf32> to vector<1x128xf32>
    %44 = vector.broadcast %42 : vector<8x1xf32> to vector<8x128xf32>
    %45 = vector.broadcast %43 : vector<1x128xf32> to vector<8x128xf32>
    %46 = arith.mulf %44, %45 : vector<8x128xf32>
    %47 = arith.addf %37, %46 : vector<8x128xf32>
    %cst_26 = arith.constant 1.000000e-03 : f32
    %48 = vector.broadcast %cst_26 : f32 to vector<8x1xf32>
    %49 = arith.addf %7, %48 : vector<8x1xf32>
    %50 = tpu.reciprocal %49 {approx = true} : vector<8x1xf32> -> vector<8x1xf32>
    %51 = vector.broadcast %50 : vector<8x1xf32> to vector<8x128xf32>
    %52 = arith.mulf %47, %51 : vector<8x128xf32>
    %c0_27 = arith.constant 0 : index
    %c0_28 = arith.constant 0 : index
    %c0_29 = arith.constant 0 : index
    %53 = vector.load %arg7[%c0_27, %c0_28, %c0_29] : memref<1x8x128xf32, #tpu.memory_space<vmem>>, vector<1x8x128xf32>
    %54 = vector.shape_cast %53 : vector<1x8x128xf32> to vector<8x128xf32>
    %55 = vector.shape_cast %52 : vector<8x128xf32> to vector<1x8x128xf32>
    tpu.vector_store %arg7[%c0_27, %c0_28, %c0_29], %55 {strides = array<i32>} : memref<1x8x128xf32, #tpu.memory_space<vmem>>, vector<1x8x128xf32>,
    return
  }
  func.func @transform_0(%arg0: i32, %arg1: i32) -> (i32, i32, i32) {
    %c0_i32 = arith.constant 0 : i32
    %c0_i32_0 = arith.constant 0 : i32
    %c0_i32_1 = arith.constant 0 : i32
    return %arg0, %c0_i32, %c0_i32_0 : i32, i32, i32
  }
  func.func @transform_1(%arg0: i32, %arg1: i32) -> (i32, i32, i32, i32) {
    %c0_i32 = arith.constant 0 : i32
    %c0_i32_0 = arith.constant 0 : i32
    %c0_i32_1 = arith.constant 0 : i32
    return %arg0, %c0_i32, %arg1, %c0_i32_0 : i32, i32, i32, i32
  }
  func.func @transform_2(%arg0: i32, %arg1: i32) -> (i32, i32, i32) {
    %c0_i32 = arith.constant 0 : i32
    %c0_i32_0 = arith.constant 0 : i32
    return %arg0, %arg1, %c0_i32 : i32, i32, i32
  }
  func.func @transform_3(%arg0: i32, %arg1: i32) -> (i32, i32) {
    %c0_i32 = arith.constant 0 : i32
    %c0_i32_0 = arith.constant 0 : i32
    %c0_i32_1 = arith.constant 0 : i32
    return %c0_i32, %c0_i32_0 : i32, i32
  }
  func.func @transform_4(%arg0: i32, %arg1: i32) -> (i32, i32) {
    %c0_i32 = arith.constant 0 : i32
    %c0_i32_0 = arith.constant 0 : i32
    %c0_i32_1 = arith.constant 0 : i32
    return %c0_i32, %c0_i32_0 : i32, i32
  }
  func.func @transform_5(%arg0: i32, %arg1: i32) -> (i32, i32, i32) {
    %c0_i32 = arith.constant 0 : i32
    %c0_i32_0 = arith.constant 0 : i32
    return %arg0, %arg1, %c0_i32 : i32, i32, i32
  }
}

</mosaic_0001>

<llo_original>
// kernel: tpu_custom_call.1
$region0: #{tpu_custom_call.1}
  #allocation0 [shape = 'u32[]', space=smem, size = 0x4, offset = 0x4, fixed_abs, tag = 'smem constant byte address 0x4 - core index']
  #allocation1 [shape = 'u32[144,128]{1,0:T(1,128)}', space=vmem, size = 0x12000, scoped, tag = 'internal scratch']
  %s0 = inlined_call_operand.vmem [shape: f32[2,8,4], index: 0, kind: input, shape index: {}]
  %s1 = inlined_call_operand.hbm [shape: f32[2,3,8,8], index: 1, kind: input, shape index: {}]
  %s2 = inlined_call_operand.vmem [shape: f32[2,8,8], index: 2, kind: input, shape index: {}]
  %s3 = inlined_call_operand.vmem [shape: f32[8,128], index: 3, kind: input, shape index: {}]
  %s4 = inlined_call_operand.vmem [shape: f32[3,128], index: 4, kind: input, shape index: {}]
  %s5 = inlined_call_operand.hbm [shape: f32[2,8,128], index: 5, kind: output, shape index: {}]
  %s6 = sld [smem:[#allocation0]]
  $region57: #{tpu_custom_call.1} parent=0
    _
  %s8 = ssub.s32 1, %s6
  %s9 = scalar_select 0, %s8, %s6
  $region1: #{tpu_custom_call.1} parent=0
    #allocation2 [shape = 'u8[24576]{0}', space=vmem, size = 0x6000, scoped, tag = 'input window, operand 1']
    #allocation3 [shape = 's32[2]{0}', space=sflag, size = 0x8, scoped, tag = 'scoped memory for tpu_custom_call.1']
    #allocation4 [shape = 's32[2]{0}', space=sflag, size = 0x8, scoped, tag = 'scoped memory for tpu_custom_call.1']
    #allocation5 [shape = 'u8[8192]{0}', space=vmem, size = 0x2000, scoped, tag = 'output window, operand 0']
    %10 = vsyncpa [#allocation3], 0
    %s11 = scalar_lea.sflag [#allocation3], 1
    %12 = vsyncpa %s11, 0
    %13 = vsyncpa [#allocation4], 0
    %s14 = scalar_lea.sflag [#allocation4], 1
    %15 = vsyncpa %s14, 0
    loop: start=0, step=1, limit=4
    $region2: #{tpu_custom_call.1} parent=1 // loop_pre_header
      _
    $region3: #{tpu_custom_call.1} parent=1 // loop_header
      %s17 = sphi 0, %s21
      %p18 = scmp.ge.s32.totalorder %s17, 4
      %s24 = sphi 0, %s36
      %s25 = sphi 0, %s32
      %s26 = sphi 0, %s24
      %s27 = sphi 0, %s25
      %s28 = sphi 0, %s26
      %s29 = sphi 0, %s27
      %s39 = sphi 0, %s41
      %s42 = sphi 0, %s39
      %s43 = sphi 0, %s42
      %s59 = sphi 0, %s43
      %s67 = sphi 0, %s69
      %s70 = sphi 0, %s67
      %s71 = sphi 0, %s70
      %s87 = sphi 0, %s71
      %s95 = sphi 0, %s97
      %s98 = sphi 0, %s95
      %s99 = sphi 0, %s98
      %s115 = sphi 0, %s99
      %s119 = sphi 0, %s119
      %s121 = sphi 0, %s119
      %s122 = sphi 0, %s121
      %s136 = sphi 0, %s122
      %s140 = sphi 0, %s140
      %s142 = sphi 0, %s140
      %s143 = sphi 0, %s142
      %s157 = sphi 0, %s143
      %s165 = sphi 0, %s167
      %s168 = sphi 0, %s165
      %s169 = sphi 0, %s168
      %s185 = sphi 0, %s169
    $region4: #{tpu_custom_call.1} parent=1 // loop_header_branch
      %20 = sbr.rel (%p18) target = $region8
    $region5: #{tpu_custom_call.1} parent=1 // loop_body
      %s22 = ssub.s32 %s17, 1
      %s23 = ssub.s32 %s17, 2
      %s30 = sadd.s32 1, %s25
      %p31 = scmp.ge.s32.totalorder %s30, 1
      %s32 = scalar_select %p31, 0, %s30
      %s33 = sadd.s32 1, %s24
      %s34 = scalar_select %p31, %s33, %s24
      %p35 = scmp.ge.s32.totalorder %s34, 2
      %s36 = scalar_select %p35, 0, %s34
      %s37 = ssub.s32 %s24, %s36
      %p38 = scmp.eq.s32.totalorder %s37, 0
      %s40 = sadd.s32 %s39, 1
      %s41 = scalar_select %p38, %s39, %s40
      %p44 = pneg %p38
      %p45 = scmp.eq.s32.totalorder %s17, 1
      %p46 = por %p44, %p45
      %p47 = scmp.ne.s32.totalorder %s39, %s42
      %p48 = scmp.eq.s32.totalorder %s17, 0
      %p49 = por %p47, %p48
      %p50 = scmp.ne.s32.totalorder %s39, %s42
      %p51 = scmp.eq.s32.totalorder %s22, 1
      %p52 = por %p50, %p51
      %p53 = scmp.ne.s32.totalorder %s42, %s43
      %p54 = scmp.eq.s32.totalorder %s22, 0
      %p55 = por %p53, %p54
      %p56 = scmp.ne.s32.totalorder %s42, %s43
      %p57 = scmp.eq.s32.totalorder %s23, 1
      %p58 = por %p56, %p57
      %p60 = scmp.ne.s32.totalorder %s43, %s59
      %p61 = scmp.eq.s32.totalorder %s23, 0
      %p62 = por %p60, %p61
      %s63 = ssub.s32 %s24, %s36
      %s64 = ssub.s32 %s25, %s32
      %s65 = sor.u32 %s63, %s64
      %p66 = scmp.eq.s32.totalorder %s65, 0
      %s68 = sadd.s32 %s67, 1
      %s69 = scalar_select %p66, %s67, %s68
      %p72 = pneg %p66
      %p73 = scmp.eq.s32.totalorder %s17, 1
      %p74 = por %p72, %p73
      %p75 = scmp.ne.s32.totalorder %s67, %s70
      %p76 = scmp.eq.s32.totalorder %s17, 0
      %p77 = por %p75, %p76
      %p78 = scmp.ne.s32.totalorder %s67, %s70
      %p79 = scmp.eq.s32.totalorder %s22, 1
      %p80 = por %p78, %p79
      %p81 = scmp.ne.s32.totalorder %s70, %s71
      %p82 = scmp.eq.s32.totalorder %s22, 0
      %p83 = por %p81, %p82
      %p84 = scmp.ne.s32.totalorder %s70, %s71
      %p85 = scmp.eq.s32.totalorder %s23, 1
      %p86 = por %p84, %p85
      %p88 = scmp.ne.s32.totalorder %s71, %s87
      %p89 = scmp.eq.s32.totalorder %s23, 0
      %p90 = por %p88, %p89
      %s91 = ssub.s32 %s24, %s36
      %s92 = ssub.s32 %s25, %s32
      %s93 = sor.u32 %s91, %s92
      %p94 = scmp.eq.s32.totalorder %s93, 0
      %s96 = sadd.s32 %s95, 1
      %s97 = scalar_select %p94, %s95, %s96
      %p100 = pneg %p94
      %p101 = scmp.eq.s32.totalorder %s17, 1
      %p102 = por %p100, %p101
      %p103 = scmp.ne.s32.totalorder %s95, %s98
      %p104 = scmp.eq.s32.totalorder %s17, 0
      %p105 = por %p103, %p104
      %p106 = scmp.ne.s32.totalorder %s95, %s98
      %p107 = scmp.eq.s32.totalorder %s22, 1
      %p108 = por %p106, %p107
      %p109 = scmp.ne.s32.totalorder %s98, %s99
      %p110 = scmp.eq.s32.totalorder %s22, 0
      %p111 = por %p109, %p110
      %p112 = scmp.ne.s32.totalorder %s98, %s99
      %p113 = scmp.eq.s32.totalorder %s23, 1
      %p114 = por %p112, %p113
      %p116 = scmp.ne.s32.totalorder %s99, %s115
      %p117 = scmp.eq.s32.totalorder %s23, 0
      %p118 = por %p116, %p117
      %s120 = sadd.s32 %s119, 1
      %p123 = scmp.eq.s32.totalorder %s17, 1
      %p124 = scmp.ne.s32.totalorder %s119, %s121
      %p125 = scmp.eq.s32.totalorder %s17, 0
      %p126 = por %p124, %p125
      %p127 = scmp.ne.s32.totalorder %s119, %s121
      %p128 = scmp.eq.s32.totalorder %s22, 1
      %p129 = por %p127, %p128
      %p130 = scmp.ne.s32.totalorder %s121, %s122
      %p131 = scmp.eq.s32.totalorder %s22, 0
      %p132 = por %p130, %p131
      %p133 = scmp.ne.s32.totalorder %s121, %s122
      %p134 = scmp.eq.s32.totalorder %s23, 1
      %p135 = por %p133, %p134
      %p137 = scmp.ne.s32.totalorder %s122, %s136
      %p138 = scmp.eq.s32.totalorder %s23, 0
      %p139 = por %p137, %p138
      %s141 = sadd.s32 %s140, 1
      %p144 = scmp.eq.s32.totalorder %s17, 1
      %p145 = scmp.ne.s32.totalorder %s140, %s142
      %p146 = scmp.eq.s32.totalorder %s17, 0
      %p147 = por %p145, %p146
      %p148 = scmp.ne.s32.totalorder %s140, %s142
      %p149 = scmp.eq.s32.totalorder %s22, 1
      %p150 = por %p148, %p149
      %p151 = scmp.ne.s32.totalorder %s142, %s143
      %p152 = scmp.eq.s32.totalorder %s22, 0
      %p153 = por %p151, %p152
      %p154 = scmp.ne.s32.totalorder %s142, %s143
      %p155 = scmp.eq.s32.totalorder %s23, 1
      %p156 = por %p154, %p155
      %p158 = scmp.ne.s32.totalorder %s143, %s157
      %p159 = scmp.eq.s32.totalorder %s23, 0
      %p160 = por %p158, %p159
      %s161 = ssub.s32 %s24, %s36
      %s162 = ssub.s32 %s25, %s32
      %s163 = sor.u32 %s161, %s162
      %p164 = scmp.eq.s32.totalorder %s163, 0
      %s166 = sadd.s32 %s165, 1
      %s167 = scalar_select %p164, %s165, %s166
      %p170 = pneg %p164
      %p171 = scmp.eq.s32.totalorder %s17, 1
      %p172 = por %p170, %p171
      %p173 = scmp.ne.s32.totalorder %s165, %s168
      %p174 = scmp.eq.s32.totalorder %s17, 0
      %p175 = por %p173, %p174
      %p176 = scmp.ne.s32.totalorder %s165, %s168
      %p177 = scmp.eq.s32.totalorder %s22, 1
      %p178 = por %p176, %p177
      %p179 = scmp.ne.s32.totalorder %s168, %s169
      %p180 = scmp.eq.s32.totalorder %s22, 0
      %p181 = por %p179, %p180
      %p182 = scmp.ne.s32.totalorder %s168, %s169
      %p183 = scmp.eq.s32.totalorder %s23, 1
      %p184 = por %p182, %p183
      %p186 = scmp.ne.s32.totalorder %s169, %s185
      %p187 = scmp.eq.s32.totalorder %s23, 0
      %p188 = por %p186, %p187
      %p189 = scmp.le.s32.totalorder 1, %s17
      %p190 = scmp.lt.s32.totalorder %s17, 3
      %p191 = pnand %p189, %p190
      %p192 = pneg %p191
      // Predicated region
      $region9: #{tpu_custom_call.1} parent=5 // pred_check
        _
      $region10: #{tpu_custom_call.1} parent=5 // pred_check_branch
        %194 = sbr.rel (%p191) target = $region12
      $region11: #{tpu_custom_call.1} parent=5 // pred_region
        %s195 = ssub.s32 %s17, 1
        // Predicated region
        $region13: #{tpu_custom_call.1} parent=11 // pred_check
          %p196 = pneg %p132
        $region14: #{tpu_custom_call.1} parent=11 // pred_check_branch
          %198 = sbr.rel (%p196) target = $region16
        $region15: #{tpu_custom_call.1} parent=11 // pred_region
          _
        $region16: #{tpu_custom_call.1} parent=11 // pred_fallthru
          _
        // Predicated region
        $region17: #{tpu_custom_call.1} parent=11 // pred_check
          %p199 = pneg %p153
        $region18: #{tpu_custom_call.1} parent=11 // pred_check_branch
          %201 = sbr.rel (%p199) target = $region20
        $region19: #{tpu_custom_call.1} parent=11 // pred_region
          _
        $region20: #{tpu_custom_call.1} parent=11 // pred_fallthru
          _
      $region12: #{tpu_custom_call.1} parent=5 // pred_fallthru
        _
      %p202 = scmp.lt.s32.totalorder %s17, 2
      // Predicated region
      $region21: #{tpu_custom_call.1} parent=5 // pred_check
        %p203 = pneg %p202
      $region22: #{tpu_custom_call.1} parent=5 // pred_check_branch
        %205 = sbr.rel (%p203) target = $region24
      $region23: #{tpu_custom_call.1} parent=5 // pred_region
        // Predicated region
        $region25: #{tpu_custom_call.1} parent=23 // pred_check
          %p206 = pneg %p49
        $region26: #{tpu_custom_call.1} parent=23 // pred_check_branch
          %208 = sbr.rel (%p206) target = $region28
        $region27: #{tpu_custom_call.1} parent=23 // pred_region
          %p209 = scmp.lt.s32.totalorder %s24, 1
          %s210 = scalar_select %p209, %s24, 1
          %s211 = smul.addr %s210, 8
          %s212 = scalar_lea.vmem %s0, %s211
        $region28: #{tpu_custom_call.1} parent=23 // pred_fallthru
          _
        // Predicated region
        $region29: #{tpu_custom_call.1} parent=23 // pred_check
          %p213 = pneg %p77
        $region30: #{tpu_custom_call.1} parent=23 // pred_check_branch
          %215 = sbr.rel (%p213) target = $region32
        $region31: #{tpu_custom_call.1} parent=23 // pred_region
          %s216 = sand.u32 %s67, 1
          %s217 = scalar_lea.sflag [#allocation3], %s216
          %s218 = sand.u32 %s67, 1
          %s219 = smul.addr %s218, 24
          %s220 = scalar_lea.vmem [#allocation2], %s219
          %s222 = ssub.s32 384, 384
          %223 = vsyncadd %s217, %s222
          %s224 = smul.addr %s24, 3
          %s225 = sadd.s32 %s25, %s224
          %s226 = smul.addr %s225, 128
          %s227 = scalar_lea.hbm %s1, %s226
          %s228 = sshll.u32 %s220, 4
          %s229 = int_to_ptr.vmem [resolvable:$true] %s228
          %234 = dma.hbm_to_vmem [thread:$0]  %s227, 384, %s229, %s217, 128, 128, 8
        $region32: #{tpu_custom_call.1} parent=23 // pred_fallthru
          _
        // Predicated region
        $region33: #{tpu_custom_call.1} parent=23 // pred_check
          %p235 = pneg %p105
        $region34: #{tpu_custom_call.1} parent=23 // pred_check_branch
          %237 = sbr.rel (%p235) target = $region36
        $region35: #{tpu_custom_call.1} parent=23 // pred_region
          %p238 = scmp.lt.s32.totalorder %s24, 1
          %s239 = scalar_select %p238, %s24, 1
          %p240 = scmp.lt.s32.totalorder %s25, 0
          %s241 = scalar_select %p240, %s25, 0
          %s242 = sadd.s32 %s241, %s239
          %s243 = smul.addr %s242, 8
          %s244 = scalar_lea.vmem %s2, %s243
        $region36: #{tpu_custom_call.1} parent=23 // pred_fallthru
          _
      $region24: #{tpu_custom_call.1} parent=5 // pred_fallthru
        _
      %p245 = scmp.le.s32.totalorder 1, %s17
      %p246 = scmp.lt.s32.totalorder %s17, 3
      %p247 = pnand %p245, %p246
      %p248 = pneg %p247
      // Predicated region
      $region37: #{tpu_custom_call.1} parent=5 // pred_check
        _
      $region38: #{tpu_custom_call.1} parent=5 // pred_check_branch
        %250 = sbr.rel (%p247) target = $region40
      $region39: #{tpu_custom_call.1} parent=5 // pred_region
        %s251 = ssub.s32 %s17, 1
        %s252 = sand.u32 %s70, 1
        %s253 = scalar_lea.sflag [#allocation3], %s252
        %s254 = sand.u32 %s70, 1
        %s255 = smul.addr %s254, 24
        %s256 = scalar_lea.vmem [#allocation2], %s255
        // Predicated region
        $region41: #{tpu_custom_call.1} parent=39 // pred_check
          %p257 = pneg %p83
        $region42: #{tpu_custom_call.1} parent=39 // pred_check_branch
          %259 = sbr.rel (%p257) target = $region44
        $region43: #{tpu_custom_call.1} parent=39 // pred_region
          %260 = dma.done %s253, 384
        $region44: #{tpu_custom_call.1} parent=39 // pred_fallthru
          _
        %p261 = scmp.lt.s32.totalorder %s26, 1
        %s262 = scalar_select %p261, %s26, 1
        %s263 = smul.addr %s262, 8
        %s264 = scalar_lea.vmem %s0, %s263
        %p265 = pneg %p55
        %p266 = pneg %p52
        %s267 = sand.u32 %s70, 1
        %s268 = scalar_lea.sflag [#allocation3], %s267
        %s269 = sand.u32 %s70, 1
        %s270 = smul.addr %s269, 24
        %s271 = scalar_lea.vmem [#allocation2], %s270
        %p272 = pneg %p83
        %p273 = pneg %p80
        %p274 = scmp.lt.s32.totalorder %s26, 1
        %s275 = scalar_select %p274, %s26, 1
        %p276 = scmp.lt.s32.totalorder %s27, 0
        %s277 = scalar_select %p276, %s27, 0
        %s278 = sadd.s32 %s277, %s275
        %s279 = smul.addr %s278, 8
        %s280 = scalar_lea.vmem %s2, %s279
        %p281 = pneg %p111
        %p282 = pneg %p108
        %p283 = pneg %p132
        %p284 = pneg %p129
        %p285 = pneg %p153
        %p286 = pneg %p150
        %p287 = pneg %p181
        %p288 = pneg %p178
        %s289 = sand.u32 %s168, 1
        %s290 = scalar_lea.sflag [#allocation4], %s289
        %s291 = sand.u32 %s168, 1
        %s292 = smul.addr %s291, 8
        %s293 = scalar_lea.vmem [#allocation5], %s292
        %p294 = scmp.lt.s32.totalorder %s26, 1
        %s295 = scalar_select %p294, %s26, 1
        %s296 = smul.addr %s295, 8
        %s297 = scalar_lea.vmem %s0, %s296
        %p298 = scmp.lt.s32.totalorder %s26, 1
        %s299 = scalar_select %p298, %s26, 1
        %p300 = scmp.lt.s32.totalorder %s27, 0
        %s301 = scalar_select %p300, %s27, 0
        %s302 = sadd.s32 %s301, %s299
        %s303 = smul.addr %s302, 8
        %s304 = scalar_lea.vmem %s2, %s303
        %v305 = vld [vmem:[%s304] sm:$0xff]
        %v306 = vld [vmem:[%s297] sm:$0xff]
        %v307 = vld [vmem:[%s3] sm:$0xff]
        %v308 = vld [vmem:[%s4] sm:$0x7]
        %vm309 = vcmask 64512
        %v310 = vsel %vm309, %v305, 0.0
        %311 = vadd.xlane.f32.xlu0 %v310
        %v312 = vpop.xlane.xlu0 %311
        %s313 = smul.u32 %s27, 8
        %s314 = scalar_lea.vmem %s297, %s313
        %v315 = vld [vmem:[%s314] sm:$0xff]
        %v317 = vsel %vm309, %v305, 0
        %319 = vmatprep.subr.mxu0 0.0
        %320 = vmatpush1.msra.mxu0 %v306
        %321 = vmatprep.subr.mxu0 0.0
        %322 = vmatpush1.msra.mxu0 0.0
        %323 = vmatprep.subr.mxu0 0.0
        %324 = vmatpush1.msra.mxu0 0.0
        %325 = vmatprep.subr.mxu0 0.0
        %326 = vmatpush1.msra.mxu0 0.0
        %327 = vmatprep.subr.mxu0 0.0
        %328 = vmatpush1.msra.mxu0 0.0
        %329 = vmatprep.subr.mxu0 0.0
        %330 = vmatpush1.msra.mxu0 0.0
        %331 = vmatprep.subr.mxu0 0.0
        %332 = vmatpush1.msra.mxu0 0.0
        %333 = vmatprep.subr.mxu0 0.0
        %334 = vmatpush1.msra.mxu0 0.0
        %335 = vmatprep.subr.mxu0 0.0
        %336 = vmatpush1.msra.mxu0 0.0
        %337 = vmatprep.subr.mxu0 0.0
        %338 = vmatpush1.msra.mxu0 0.0
        %339 = vmatprep.subr.mxu0 0.0
        %340 = vmatpush1.msra.mxu0 0.0
        %341 = vmatprep.subr.mxu0 0.0
        %342 = vmatpush1.msra.mxu0 0.0
        %343 = vmatprep.subr.mxu0 0.0
        %344 = vmatpush1.msra.mxu0 0.0
        %345 = vmatprep.subr.mxu0 0.0
        %346 = vmatpush1.msra.mxu0 0.0
        %347 = vmatprep.subr.mxu0 0.0
        %348 = vmatpush1.msra.mxu0 0.0
        %349 = vmatprep.subr.mxu0 0.0
        %350 = vmatpush1.msra.mxu0 0.0
        %351 = vmatprep.subr.mxu0 0.0
        %352 = vmatpush1.msra.mxu0 0.0
        %353 = vmatprep.subr.mxu0 0.0
        %354 = vmatpush1.msra.mxu0 0.0
        %355 = vmatprep.subr.mxu0 0.0
        %356 = vmatpush1.msra.mxu0 0.0
        %357 = vmatprep.subr.mxu0 0.0
        %358 = vmatpush1.msra.mxu0 0.0
        %359 = vmatprep.subr.mxu0 0.0
        %360 = vmatpush1.msra.mxu0 0.0
        %361 = vmatprep.subr.mxu0 0.0
        %362 = vmatpush1.msra.mxu0 0.0
        %363 = vmatprep.subr.mxu0 0.0
        %364 = vmatpush1.msra.mxu0 0.0
        %365 = vmatprep.subr.mxu0 0.0
        %366 = vmatpush1.msra.mxu0 0.0
        %367 = vmatprep.subr.mxu0 0.0
        %368 = vmatpush1.msra.mxu0 0.0
        %369 = vmatprep.subr.mxu0 0.0
        %370 = vmatpush1.msra.mxu0 0.0
        %371 = vmatprep.subr.mxu0 0.0
        %372 = vmatpush1.msra.mxu0 0.0
        %373 = vmatprep.subr.mxu0 0.0
        %374 = vmatpush1.msra.mxu0 0.0
        %375 = vmatprep.subr.mxu0 0.0
        %376 = vmatpush1.msra.mxu0 0.0
        %377 = vmatprep.subr.mxu0 0.0
        %378 = vmatpush1.msra.mxu0 0.0
        %379 = vmatprep.subr.mxu0 0.0
        %380 = vmatpush1.msra.mxu0 0.0
        %381 = vmatprep.subr.mxu0 0.0
        %382 = vmatpush1.msra.mxu0 0.0
        %383 = vmatprep.mubr.f32.mxu0 0.0
        %384 = vmatmul.mubr.f32.gmra.mrb[0].mxu0 %v317
        %v385 = vpop.f32.mrb[0].mxu0
        %v386 = vadd.f32 0.0, %v385
        %v387 = vpop.f32.mrb[0].mxu0
        %388 = vdwg.mxu0
        %v389 = vmul.f32 %v312, %v315
        %391 = vrot.lane.b32.xlu0 %v386, 4
        %v392 = vpop.permute.xlu0 %391
        %vm394 = vcmask 31744
        %v395 = vsel %vm394, %v389, %v392
        %v396 = vld [vmem:[%s256] sm:$0xff]
        %v397 = vmul.f32 %v396, %v305
        %v398 = vsel %vm309, %v397, 0.0
        %399 = vadd.xlane.f32.xlu0 %v398
        %v400 = vpop.xlane.xlu0 %399
        %v401 = vlaneseq
        %v402 = vshrl.u32 %v401, 7
        %v403 = vsub.s32 0, %v402
        %v404 = vrot.slane %v308, %v403
        %v405 = vmul.f32 %v400, %v404
        %v407 = vsel %vm309, %v395, 0
        %409 = vmatprep.subr.mxu0 0.0
        %410 = vmatpush1.msra.mxu0 %v307
        %411 = vmatprep.subr.mxu0 0.0
        %412 = vmatpush1.msra.mxu0 0.0
        %413 = vmatprep.subr.mxu0 0.0
        %414 = vmatpush1.msra.mxu0 0.0
        %415 = vmatprep.subr.mxu0 0.0
        %416 = vmatpush1.msra.mxu0 0.0
        %417 = vmatprep.subr.mxu0 0.0
        %418 = vmatpush1.msra.mxu0 0.0
        %419 = vmatprep.subr.mxu0 0.0
        %420 = vmatpush1.msra.mxu0 0.0
        %421 = vmatprep.subr.mxu0 0.0
        %422 = vmatpush1.msra.mxu0 0.0
        %423 = vmatprep.subr.mxu0 0.0
        %424 = vmatpush1.msra.mxu0 0.0
        %425 = vmatprep.subr.mxu0 0.0
        %426 = vmatpush1.msra.mxu0 0.0
        %427 = vmatprep.subr.mxu0 0.0
        %428 = vmatpush1.msra.mxu0 0.0
        %429 = vmatprep.subr.mxu0 0.0
        %430 = vmatpush1.msra.mxu0 0.0
        %431 = vmatprep.subr.mxu0 0.0
        %432 = vmatpush1.msra.mxu0 0.0
        %433 = vmatprep.subr.mxu0 0.0
        %434 = vmatpush1.msra.mxu0 0.0
        %435 = vmatprep.subr.mxu0 0.0
        %436 = vmatpush1.msra.mxu0 0.0
        %437 = vmatprep.subr.mxu0 0.0
        %438 = vmatpush1.msra.mxu0 0.0
        %439 = vmatprep.subr.mxu0 0.0
        %440 = vmatpush1.msra.mxu0 0.0
        %441 = vmatprep.subr.mxu0 0.0
        %442 = vmatpush1.msra.mxu0 0.0
        %443 = vmatprep.subr.mxu0 0.0
        %444 = vmatpush1.msra.mxu0 0.0
        %445 = vmatprep.subr.mxu0 0.0
        %446 = vmatpush1.msra.mxu0 0.0
        %447 = vmatprep.subr.mxu0 0.0
        %448 = vmatpush1.msra.mxu0 0.0
        %449 = vmatprep.subr.mxu0 0.0
        %450 = vmatpush1.msra.mxu0 0.0
        %451 = vmatprep.subr.mxu0 0.0
        %452 = vmatpush1.msra.mxu0 0.0
        %453 = vmatprep.subr.mxu0 0.0
        %454 = vmatpush1.msra.mxu0 0.0
        %455 = vmatprep.subr.mxu0 0.0
        %456 = vmatpush1.msra.mxu0 0.0
        %457 = vmatprep.subr.mxu0 0.0
        %458 = vmatpush1.msra.mxu0 0.0
        %459 = vmatprep.subr.mxu0 0.0
        %460 = vmatpush1.msra.mxu0 0.0
        %461 = vmatprep.subr.mxu0 0.0
        %462 = vmatpush1.msra.mxu0 0.0
        %463 = vmatprep.subr.mxu0 0.0
        %464 = vmatpush1.msra.mxu0 0.0
        %465 = vmatprep.subr.mxu0 0.0
        %466 = vmatpush1.msra.mxu0 0.0
        %467 = vmatprep.subr.mxu0 0.0
        %468 = vmatpush1.msra.mxu0 0.0
        %469 = vmatprep.subr.mxu0 0.0
        %470 = vmatpush1.msra.mxu0 0.0
        %471 = vmatprep.subr.mxu0 0.0
        %472 = vmatpush1.msra.mxu0 0.0
        %473 = vmatprep.mubr.f32.mxu0 0.0
        %474 = vmatmul.mubr.f32.gmra.mrb[0].mxu0 %v407
        %v475 = vpop.f32.mrb[0].mxu0
        %v476 = vadd.f32 %v405, %v475
        %v477 = vpop.f32.mrb[0].mxu0
        %478 = vdwg.mxu0
        %s479 = scalar_lea.vmem %s256, 8 [#allocation2]
        %v480 = vld [vmem:[%s479] sm:$0xff]
        %v481 = vmul.f32 %v480, %v305
        %v482 = vsel %vm309, %v481, 0.0
        %483 = vadd.xlane.f32.xlu0 %v482
        %v484 = vpop.xlane.xlu0 %483
        %v485 = vlaneseq
        %v486 = vshrl.u32 %v485, 7
        %v487 = vsub.s32 1, %v486
        %v488 = vrot.slane %v308, %v487
        %v489 = vmul.f32 %v484, %v488
        %v490 = vadd.f32 %v476, %v489
        %s491 = scalar_lea.vmem %s256, 16 [#allocation2]
        %v492 = vld [vmem:[%s491] sm:$0xff]
        %v493 = vmul.f32 %v492, %v305
        %v494 = vsel %vm309, %v493, 0.0
        %495 = vadd.xlane.f32.xlu0 %v494
        %v496 = vpop.xlane.xlu0 %495
        %v497 = vlaneseq
        %v498 = vshrl.u32 %v497, 7
        %v499 = vsub.s32 2, %v498
        %v500 = vrot.slane %v308, %v499
        %v501 = vmul.f32 %v496, %v500
        %v502 = vadd.f32 %v490, %v501
        %v503 = vadd.f32 %v312, 0.001
        %v504 = vrcp.pop %v503
        %v505 = vmul.f32 %v502, %v504
        %506 = vst [vmem:[%s293] sm:$0xff] %v505
        %s507 = sand.u32 %s168, 1
        %s508 = scalar_lea.sflag [#allocation4], %s507
        %s509 = sand.u32 %s168, 1
        %s510 = smul.addr %s509, 8
        %s511 = scalar_lea.vmem [#allocation5], %s510
        // Predicated region
        $region45: #{tpu_custom_call.1} parent=39 // pred_check
          %p512 = pneg %p178
        $region46: #{tpu_custom_call.1} parent=39 // pred_check_branch
          %514 = sbr.rel (%p512) target = $region48
        $region47: #{tpu_custom_call.1} parent=39 // pred_region
          %s516 = ssub.s32 128, 128
          %517 = vsyncadd %s508, %s516
          %s518 = sadd.s32 %s27, %s26
          %s519 = smul.addr %s518, 128
          %s520 = scalar_lea.hbm %s5, %s519
          %s522 = sshll.u32 %s511, 4
          %s523 = int_to_ptr.vmem [resolvable:$true] %s522
          %525 = dma.vmem_to_hbm [thread:$0]  %s523, 128, %s520, %s508
        $region48: #{tpu_custom_call.1} parent=39 // pred_fallthru
          _
      $region40: #{tpu_custom_call.1} parent=5 // pred_fallthru
        _
      %p526 = scmp.le.s32.totalorder 2, %s17
      // Predicated region
      $region49: #{tpu_custom_call.1} parent=5 // pred_check
        %p527 = pneg %p526
      $region50: #{tpu_custom_call.1} parent=5 // pred_check_branch
        %529 = sbr.rel (%p527) target = $region52
      $region51: #{tpu_custom_call.1} parent=5 // pred_region
        %s530 = ssub.s32 %s17, 2
        // Predicated region
        $region53: #{tpu_custom_call.1} parent=51 // pred_check
          %p531 = pneg %p184
        $region54: #{tpu_custom_call.1} parent=51 // pred_check_branch
          %533 = sbr.rel (%p531) target = $region56
        $region55: #{tpu_custom_call.1} parent=51 // pred_region
          %s534 = sand.u32 %s169, 1
          %s535 = scalar_lea.sflag [#allocation4], %s534
          %s536 = sand.u32 %s169, 1
          %s537 = smul.addr %s536, 8
          %s538 = scalar_lea.vmem [#allocation5], %s537
          %539 = dma.done %s535, 128
        $region56: #{tpu_custom_call.1} parent=51 // pred_fallthru
          _
      $region52: #{tpu_custom_call.1} parent=5 // pred_fallthru
        _
    $region6: #{tpu_custom_call.1} parent=1 // loop_footer
      %s21 = sadd.s32 1, %s17
    $region7: #{tpu_custom_call.1} parent=1 // loop_footer_branch
      %16 = sbr.rel target = $region3
    $region8: #{tpu_custom_call.1} parent=1 // loop_exit
      _
    %540 = vsyncpa [#allocation3], 1
    %s541 = scalar_lea.sflag [#allocation3], 1
    %542 = vsyncpa %s541, 1
    %543 = vsyncpa [#allocation4], 1
    %s544 = scalar_lea.sflag [#allocation4], 1
    %545 = vsyncpa %s544, 1

</llo_original>
